<compile_context>
chip_gen: v7x
topology: tpu7x:2x2x1
jax: 0.10.0
libtpu: 0.0.40
codegen_flags: <defaults>
</compile_context>

<pallas_src>
import functools

import jax
import jax.numpy as jnp
from jax.experimental import pallas as pl
from jax.experimental.pallas import tpu as pltpu


# ---------------------------------------------------------------------------
# device introspection (safe fallbacks if the query is unavailable)
# ---------------------------------------------------------------------------
def _vmem_capacity_bytes():
    try:
        return int(pltpu.get_tpu_info().vmem_capacity_bytes)
    except Exception:
        return 64 * 2**20   # conservative: v7x per-TensorCore VMEM


def _num_tensorcores():
    try:
        kind = jax.devices()[0].device_kind.lower()
        if "v7" in kind or "7x" in kind:
            return 2
    except Exception:
        pass
    return 1


# ---------------------------------------------------------------------------
# single-pass kernel: whole (Bt, C, HW) slab resident per grid step
# ---------------------------------------------------------------------------
def _se_kernel(x_ref, w1t_ref, w2t_ref, o_ref, *, mode, inv_hw):
    # x/o block: (Bt, C, HW) native dtype; w1t: (C, Cr) f32; w2t: (Cr, C) f32.
    x = x_ref[...]

    # Squeeze: global pool over the spatial axis -> (Bt, C) in f32.
    if mode == "avg":
        v = jnp.sum(x, axis=-1, dtype=jnp.float32) * inv_hw   # cast fused in reduce
    else:  # 'max'
        v = jnp.max(x, axis=-1).astype(jnp.float32)

    # Excite: tiny batched GEMMs on the MXU (hidden under DMA).
    h = jnp.maximum(jnp.dot(v, w1t_ref[...], preferred_element_type=jnp.float32), 0.0)
    s = jax.nn.sigmoid(jnp.dot(h, w2t_ref[...], preferred_element_type=jnp.float32))

    # Scale: per-channel broadcast multiply in the slab's native dtype.
    o_ref[...] = (x * s[:, :, None].astype(x.dtype)).astype(o_ref.dtype)


def _se_single_pass(x3, w1t, w2t, mode, block_budget, vmem_budget, cost):
    B, C, HW = x3.shape
    itemsize = jnp.dtype(x3.dtype).itemsize
    bytes_per_row = C * HW * itemsize

    rows = max(1, block_budget // bytes_per_row)
    # Split the batch axis across v7x's 2 TensorCores only if each per-step
    # block stays comfortably large (>= 1 MiB); never on v5e/v6e (1 TC).
    if _num_tensorcores() >= 2 and B > 1:
        half = -(-B // 2)
        if half * bytes_per_row >= 1 * 2**20:
            rows = min(rows, half)
    Bt = int(min(B, rows))
    grid = (pl.cdiv(B, Bt),)

    block_bytes = Bt * bytes_per_row
    # in + out double-buffered ~= 4x block + resident weights + headroom.
    vmem_limit = int(min(vmem_budget, max(32 * 2**20, 5 * block_bytes + 2 * 2**20)))

    kernel = functools.partial(_se_kernel, mode=mode, inv_hw=1.0 / HW)
    return pl.pallas_call(
        kernel,
        out_shape=jax.ShapeDtypeStruct((B, C, HW), x3.dtype),
        grid_spec=pltpu.PrefetchScalarGridSpec(
            num_scalar_prefetch=0,
            grid=grid,
            in_specs=[
                pl.BlockSpec((Bt, C, HW), lambda b: (b, 0, 0)),
                pl.BlockSpec(w1t.shape, lambda b: (0, 0)),   # resident f32 weights
                pl.BlockSpec(w2t.shape, lambda b: (0, 0)),
            ],
            out_specs=pl.BlockSpec((Bt, C, HW), lambda b: (b, 0, 0)),
        ),
        compiler_params=pltpu.CompilerParams(
            dimension_semantics=("parallel",),
            vmem_limit_bytes=vmem_limit),
        cost_estimate=cost,
    )(x3, w1t, w2t)


# ---------------------------------------------------------------------------
# two-pass fallback: HW-tiled pool+excite, then HW-tiled scale
# (used when one batch row exceeds the per-block VMEM budget)
# ---------------------------------------------------------------------------
def _se_pool_kernel(x_ref, w1t_ref, w2t_ref, s_ref, acc_ref, *, mode, inv_hw, hw, thw):
    h = pl.program_id(1)

    @pl.when(h == 0)
    def _():
        if mode == "avg":
            acc_ref[...] = jnp.zeros_like(acc_ref)
        else:
            acc_ref[...] = jnp.full_like(acc_ref, -jnp.inf)

    x = x_ref[...]                                            # (1, C, thw)
    # Mask the partial tail tile: OOB lanes of a partial input block are
    # undefined, so exclude them from the reduction.
    lane = jax.lax.broadcasted_iota(jnp.int32, x.shape, 2) + h * thw
    valid = lane < hw
    if mode == "avg":
        xm = jnp.where(valid, x, jnp.zeros_like(x))
        acc_ref[...] += jnp.sum(xm, axis=-1, dtype=jnp.float32)
    else:
        xm = jnp.where(valid, x, jnp.full_like(x, -jnp.inf))
        acc_ref[...] = jnp.maximum(acc_ref[...], jnp.max(xm, axis=-1).astype(jnp.float32))

    @pl.when(h == pl.num_programs(1) - 1)
    def _():
        v = acc_ref[...] * inv_hw if mode == "avg" else acc_ref[...]   # (1, C)
        hh = jnp.maximum(jnp.dot(v, w1t_ref[...], preferred_element_type=jnp.float32), 0.0)
        s = jax.nn.sigmoid(jnp.dot(hh, w2t_ref[...], preferred_element_type=jnp.float32))
        s_ref[...] = s[:, :, None]                             # (1, C, 1) f32


def _se_scale_kernel(x_ref, s_ref, o_ref):
    x = x_ref[...]                                            # (1, C, thw)
    s = s_ref[...]                                            # (1, C, 1)
    o_ref[...] = (x * s.astype(x.dtype)).astype(o_ref.dtype)


def _se_two_pass(x3, w1t, w2t, mode, block_budget, vmem_budget, cost):
    B, C, HW = x3.shape
    itemsize = jnp.dtype(x3.dtype).itemsize
    Cr = w1t.shape[1]

    # HW tile: multiple of 128, sized toward the block budget; one row per step.
    thw = max(128, (block_budget // (C * itemsize)) // 128 * 128)
    thw = min(thw, pl.cdiv(HW, 128) * 128)
    n_hw = pl.cdiv(HW, thw)

    block_bytes = C * thw * itemsize
    vmem_limit = int(min(vmem_budget, max(32 * 2**20, 5 * block_bytes + 2 * 2**20)))

    pool_kernel = functools.partial(
        _se_pool_kernel, mode=mode, inv_hw=1.0 / HW, hw=HW, thw=thw)

    # Pass 1: HW-tiled reduction into a (B, C, 1) excitation vector.
    s = pl.pallas_call(
        pool_kernel,
        out_shape=jax.ShapeDtypeStruct((B, C, 1), jnp.float32),
        grid_spec=pltpu.PrefetchScalarGridSpec(
            num_scalar_prefetch=0,
            grid=(B, n_hw),
            in_specs=[
                pl.BlockSpec((1, C, thw), lambda b, h: (b, 0, h)),
                pl.BlockSpec(w1t.shape, lambda b, h: (0, 0)),
                pl.BlockSpec(w2t.shape, lambda b, h: (0, 0)),
            ],
            out_specs=pl.BlockSpec((1, C, 1), lambda b, h: (b, 0, 0)),
            scratch_shapes=[pltpu.VMEM((1, C), jnp.float32)],
        ),
        compiler_params=pltpu.CompilerParams(
            dimension_semantics=("parallel", "arbitrary"),
            vmem_limit_bytes=vmem_limit),
        cost_estimate=pl.CostEstimate(
            flops=B * C * HW + 4 * B * C * Cr,
            transcendentals=B * C,
            bytes_accessed=B * C * HW * itemsize),
    )(x3, w1t, w2t)

    # Pass 2: HW-tiled per-channel scale (one extra HBM read of x, unavoidable
    # once the slab cannot stay resident).
    out3 = pl.pallas_call(
        _se_scale_kernel,
        out_shape=jax.ShapeDtypeStruct((B, C, HW), x3.dtype),
        grid_spec=pltpu.PrefetchScalarGridSpec(
            num_scalar_prefetch=0,
            grid=(B, n_hw),
            in_specs=[
                pl.BlockSpec((1, C, thw), lambda b, h: (b, 0, h)),
                pl.BlockSpec((1, C, 1), lambda b, h: (b, 0, 0)),
            ],
            out_specs=pl.BlockSpec((1, C, thw), lambda b, h: (b, 0, h)),
        ),
        compiler_params=pltpu.CompilerParams(
            dimension_semantics=("parallel", "parallel"),
            vmem_limit_bytes=vmem_limit),
        cost_estimate=pl.CostEstimate(
            flops=B * C * HW,
            transcendentals=0,
            bytes_accessed=2 * B * C * HW * itemsize),
    )(x3, s)
    return out3


# ---------------------------------------------------------------------------
# wrapper
# ---------------------------------------------------------------------------
def se_block(x, w1, w2, mode="avg", *, block_bytes_target=None):
    """SEBlock forward.  x: (B,C,H,W) NCHW; w1: (C//ratio, C); w2: (C, C//ratio)."""
    assert mode in ("avg", "max")
    B, C, H, W = x.shape
    HW = H * W
    Cr = w1.shape[0]
    itemsize = jnp.dtype(x.dtype).itemsize

    vmem_budget = int(0.75 * _vmem_capacity_bytes())
    if block_bytes_target is None:
        block_bytes_target = 8 * 2**20           # amortizes per-step overhead
    # x block is double-buffered for both input and output (~4x) + headroom.
    max_block_bytes = max(1 * 2**20, (vmem_budget - 4 * 2**20) // 4)
    block_budget = min(block_bytes_target, max_block_bytes)

    x3 = x.reshape(B, C, HW)                     # no spatial padding / slicing
    # Transpose/cast weights once; their VMEM blocks stay resident across steps.
    w1t = w1.T.astype(jnp.float32)               # (C, Cr)
    w2t = w2.T.astype(jnp.float32)               # (Cr, C)

    cost = pl.CostEstimate(
        flops=2 * B * C * HW + 4 * B * C * Cr,
        transcendentals=B * C,
        bytes_accessed=2 * B * C * HW * itemsize)

    bytes_per_row = C * HW * itemsize
    if bytes_per_row <= block_budget:
        out3 = _se_single_pass(x3, w1t, w2t, mode, block_budget, vmem_budget, cost)
    else:
        out3 = _se_two_pass(x3, w1t, w2t, mode, block_budget, vmem_budget, cost)
    return out3.reshape(B, C, H, W)


def _se_reference(x, w1, w2, mode="avg"):
    if mode == "avg":
        v = jnp.mean(x, axis=(2, 3))                         # (B, C)
    else:
        v = jnp.max(x, axis=(2, 3))
    h = jnp.maximum(v @ w1.T, 0.0)                           # (B, C//r)
    s = jax.nn.sigmoid(h @ w2.T)                             # (B, C)
    return x * s[:, :, None, None]


if __name__ == "__main__":
    # SE config as used inside CrossNet's crossblock at depth i=2 with dim=4:
    # outc = dim * 2**i = 16  ->  SE channels = 3*outc//2 = 24, ratio = 2.
    # H = W = 14 exercises the non-128-aligned HW (196) masked-tail-store path.
    B, C, H, W = 2, 24, 14, 14
    ratio = 2
    Cr = C // ratio

    key = jax.random.PRNGKey(0)
    kx, k1, k2 = jax.random.split(key, 3)
    x = jax.random.normal(kx, (B, C, H, W), dtype=jnp.float32)
    # nn.Linear weights: (out_features, in_features), bias=False.
    w1 = jax.random.normal(k1, (Cr, C), dtype=jnp.float32) * 0.3
    w2 = jax.random.normal(k2, (C, Cr), dtype=jnp.float32) * 0.3

    for mode in ("avg", "max"):   # CrossNet's SE uses 'avg'
        out = jax.block_until_ready(se_block(x, w1, w2, mode=mode))
        ref = _se_reference(x, w1, w2, mode=mode)
        assert out.shape == (B, C, H, W)
        assert jnp.allclose(out, ref, atol=1e-4, rtol=1e-4), mode

    # Exercise the HW-tiled two-pass fallback (used when one batch row exceeds
    # the VMEM block budget) by forcing a tiny budget on a non-aligned HW=900.
    x2 = jax.random.normal(jax.random.PRNGKey(1), (2, C, 30, 30), dtype=jnp.float32)
    for mode in ("avg", "max"):
        out = jax.block_until_ready(
            se_block(x2, w1, w2, mode=mode, block_bytes_target=64 * 1024))
        ref = _se_reference(x2, w1, w2, mode=mode)
        assert out.shape == x2.shape
        assert jnp.allclose(out, ref, atol=1e-4, rtol=1e-4), ("fallback", mode)

    # TODO(synk): CrossNet's Conv2d / GroupNorm-BatchNorm / ReLU / MaxPool
    # stages are left to XLA (lax.conv etc.); only the crossblock SE stage is
    # implemented as a Pallas kernel.
    print("KERNEL_OK")
</pallas_src>

<mosaic_0001>
module attributes {stable_mosaic.version = 11 : i64} {
  func.func @_se_kernel(%arg0: i32, %arg1: memref<2x24x196xf32, #tpu.memory_space<vmem>>, %arg2: memref<24x12xf32, #tpu.memory_space<vmem>>, %arg3: memref<12x24xf32, #tpu.memory_space<vmem>>, %arg4: memref<2x24x196xf32, #tpu.memory_space<vmem>>) attributes {dimension_semantics = [#tpu.dimension_semantics<parallel>], iteration_bounds = array<i64: 1>, scalar_prefetch = 0 : i64, scratch_operands = 0 : i64, tpu.core_type = #tpu.core_type<tc>, window_params = [{transform_indices = @transform_0, window_bounds = array<i64: 2, 24, 196>}, {pipeline_mode = #tpu.pipeline_mode<synchronous>, transform_indices = @transform_1, window_bounds = array<i64: 24, 12>}, {pipeline_mode = #tpu.pipeline_mode<synchronous>, transform_indices = @transform_2, window_bounds = array<i64: 12, 24>}, {transform_indices = @transform_3, window_bounds = array<i64: 2, 24, 196>}]} {
    %c0 = arith.constant 0 : index
    %c0_0 = arith.constant 0 : index
    %c0_1 = arith.constant 0 : index
    %0 = vector.load %arg1[%c0, %c0_0, %c0_1] : memref<2x24x196xf32, #tpu.memory_space<vmem>>, vector<2x24x196xf32>
    %cst = arith.constant dense<0.000000e+00> : vector<2x24xf32>
    %1 = vector.multi_reduction <add>, %0, %cst [2] : vector<2x24x196xf32> to vector<2x24xf32>
    %cst_2 = arith.constant 0.00510204071 : f32
    %2 = vector.broadcast %cst_2 : f32 to vector<2x24xf32>
    %3 = arith.mulf %1, %2 : vector<2x24xf32>
    %c0_3 = arith.constant 0 : index
    %c0_4 = arith.constant 0 : index
    %4 = vector.load %arg2[%c0_3, %c0_4] : memref<24x12xf32, #tpu.memory_space<vmem>>, vector<24x12xf32>
    %cst_5 = arith.constant dense<0.000000e+00> : vector<2x12xf32>
    %5 = tpu.matmul %3, %4, %cst_5 {dimension_numbers = #tpu.dot_dimension_numbers<[1], [0], [0], [1], [0, 0, 1, 1], [], []>} : vector<2x24xf32>, vector<24x12xf32>, vector<2x12xf32> -> vector<2x12xf32>
    %cst_6 = arith.constant 0.000000e+00 : f32
    %6 = vector.broadcast %cst_6 : f32 to vector<2x12xf32>
    %7 = arith.maximumf %5, %6 : vector<2x12xf32>
    %c0_7 = arith.constant 0 : index
    %c0_8 = arith.constant 0 : index
    %8 = vector.load %arg3[%c0_7, %c0_8] : memref<12x24xf32, #tpu.memory_space<vmem>>, vector<12x24xf32>
    %cst_9 = arith.constant dense<0.000000e+00> : vector<2x24xf32>
    %9 = tpu.matmul %7, %8, %cst_9 {dimension_numbers = #tpu.dot_dimension_numbers<[1], [0], [0], [1], [0, 0, 1, 1], [], []>} : vector<2x12xf32>, vector<12x24xf32>, vector<2x24xf32> -> vector<2x24xf32>
    %10 = arith.negf %9 : vector<2x24xf32>
    %11 = math.exp %10 : vector<2x24xf32>
    %cst_10 = arith.constant 1.000000e+00 : f32
    %12 = vector.broadcast %cst_10 : f32 to vector<2x24xf32>
    %13 = arith.addf %12, %11 : vector<2x24xf32>
    %14 = arith.divf %12, %13 : vector<2x24xf32>
    %15 = vector.shape_cast %14 : vector<2x24xf32> to vector<2x24x1xf32>
    %16 = vector.broadcast %15 : vector<2x24x1xf32> to vector<2x24x196xf32>
    %17 = arith.mulf %0, %16 : vector<2x24x196xf32>
    %c0_11 = arith.constant 0 : index
    %c0_12 = arith.constant 0 : index
    %c0_13 = arith.constant 0 : index
    %18 = vector.load %arg4[%c0_11, %c0_12, %c0_13] : memref<2x24x196xf32, #tpu.memory_space<vmem>>, vector<2x24x196xf32>
    tpu.vector_store %arg4[%c0_11, %c0_12, %c0_13], %17 {strides = array<i32>} : memref<2x24x196xf32, #tpu.memory_space<vmem>>, vector<2x24x196xf32>,
    return
  }
  func.func @transform_0(%arg0: i32) -> (i32, i32, i32) {
    %c0_i32 = arith.constant 0 : i32
    %c0_i32_0 = arith.constant 0 : i32
    %c0_i32_1 = arith.constant 0 : i32
    return %arg0, %c0_i32, %c0_i32_0 : i32, i32, i32
  }
  func.func @transform_1(%arg0: i32) -> (i32, i32) {
    %c0_i32 = arith.constant 0 : i32
    %c0_i32_0 = arith.constant 0 : i32
    %c0_i32_1 = arith.constant 0 : i32
    return %c0_i32, %c0_i32_0 : i32, i32
  }
  func.func @transform_2(%arg0: i32) -> (i32, i32) {
    %c0_i32 = arith.constant 0 : i32
    %c0_i32_0 = arith.constant 0 : i32
    %c0_i32_1 = arith.constant 0 : i32
    return %c0_i32, %c0_i32_0 : i32, i32
  }
  func.func @transform_3(%arg0: i32) -> (i32, i32, i32) {
    %c0_i32 = arith.constant 0 : i32
    %c0_i32_0 = arith.constant 0 : i32
    %c0_i32_1 = arith.constant 0 : i32
    return %arg0, %c0_i32, %c0_i32_0 : i32, i32, i32
  }
}

</mosaic_0001>

<llo_original>
// kernel: tpu_custom_call.1
$region0: #{tpu_custom_call.1}
  #allocation0 [shape = 'u32[]', space=smem, size = 0x4, offset = 0x4, fixed_abs, tag = 'smem constant byte address 0x4 - core index']
  #allocation1 [shape = 'u32[144,128]{1,0:T(1,128)}', space=vmem, size = 0x12000, scoped, tag = 'internal scratch']
  %s0 = inlined_call_operand.hbm [shape: f32[2,24,196], index: 0, kind: input, shape index: {}]
  %s1 = inlined_call_operand.vmem [shape: f32[24,12], index: 1, kind: input, shape index: {}]
  %s2 = inlined_call_operand.vmem [shape: f32[12,24], index: 2, kind: input, shape index: {}]
  %s3 = inlined_call_operand.hbm [shape: f32[2,24,196], index: 3, kind: output, shape index: {}]
  %s4 = sld [smem:[#allocation0]]
  $region26: #{tpu_custom_call.1} parent=0
    _
  %s6 = ssub.s32 1, %s4
  %s7 = scalar_select 0, %s6, %s4
  $region1: #{tpu_custom_call.1} parent=0
    #allocation2 [shape = 'u8[49152]{0}', space=vmem, size = 0xc000, scoped, tag = 'input window, operand 0, single buffered']
    #allocation3 [shape = 's32[1]{0}', space=sflag, size = 0x4, scoped, tag = 'scoped memory for tpu_custom_call.1']
    #allocation4 [shape = 's32[1]{0}', space=sflag, size = 0x4, scoped, tag = 'scoped memory for tpu_custom_call.1']
    #allocation5 [shape = 'u8[49152]{0}', space=vmem, size = 0xc000, scoped, tag = 'output window, operand 0, single buffered']
    %8 = vsyncpa [#allocation3], 0
    %9 = vsyncpa [#allocation4], 0
    // Predicated region
    $region2: #{tpu_custom_call.1} parent=1 // pred_check
      _
    $region3: #{tpu_custom_call.1} parent=1 // pred_check_branch
      %11 = sbr.rel (0) target = $region5
    $region4: #{tpu_custom_call.1} parent=1 // pred_region
      %s13 = ssub.s32 1536, 1536
      %14 = vsyncadd [#allocation3], %s13
      %s15 = sshll.u32 [#allocation2], 4
      %s16 = int_to_ptr.vmem [resolvable:$true] %s15
      %21 = dma.hbm_to_vmem [thread:$0]  %s0, 1536, %s16, [#allocation3], 256, 256, 16
    $region5: #{tpu_custom_call.1} parent=1 // pred_fallthru
      _
    // Predicated region
    $region6: #{tpu_custom_call.1} parent=1 // pred_check
      _
    $region7: #{tpu_custom_call.1} parent=1 // pred_check_branch
      %23 = sbr.rel (0) target = $region9
    $region8: #{tpu_custom_call.1} parent=1 // pred_region
      _
    $region9: #{tpu_custom_call.1} parent=1 // pred_fallthru
      _
    // Predicated region
    $region10: #{tpu_custom_call.1} parent=1 // pred_check
      _
    $region11: #{tpu_custom_call.1} parent=1 // pred_check_branch
      %25 = sbr.rel (0) target = $region13
    $region12: #{tpu_custom_call.1} parent=1 // pred_region
      _
    $region13: #{tpu_custom_call.1} parent=1 // pred_fallthru
      _
    // Predicated region
    $region14: #{tpu_custom_call.1} parent=1 // pred_check
      _
    $region15: #{tpu_custom_call.1} parent=1 // pred_check_branch
      %27 = sbr.rel (0) target = $region17
    $region16: #{tpu_custom_call.1} parent=1 // pred_region
      %28 = dma.done [#allocation3], 1536
    $region17: #{tpu_custom_call.1} parent=1 // pred_fallthru
      _
    %v29 = vld [vmem:[#allocation2] sm:$0xff]
    %v30 = vld [vmem:[#allocation2 + $0x8] sm:$0xff]
    %v31 = vld [vmem:[#allocation2 + $0x10] sm:$0xff]
    %v32 = vld [vmem:[#allocation2 + $0x18] sm:$0xff]
    %v33 = vld [vmem:[#allocation2 + $0x20] sm:$0xff]
    %v34 = vld [vmem:[#allocation2 + $0x28] sm:$0xff]
    %v35 = vld [vmem:[#allocation2 + $0x30] sm:$0xff]
    %v36 = vld [vmem:[#allocation2 + $0x38] sm:$0xff]
    %v37 = vld [vmem:[#allocation2 + $0x40] sm:$0xff]
    %v38 = vld [vmem:[#allocation2 + $0x48] sm:$0xff]
    %v39 = vld [vmem:[#allocation2 + $0x50] sm:$0xff]
    %v40 = vld [vmem:[#allocation2 + $0x58] sm:$0xff]
    %vm41 = vcmask 556032
    %v42 = vsel %vm41, %v30, 0.0
    %v43 = vadd.f32 %v29, %v42
    %44 = vadd.xlane.f32.xlu0 %v43
    %v45 = vpop.xlane.xlu0 %44
    %v46 = vsel %vm41, %v32, 0.0
    %v47 = vadd.f32 %v31, %v46
    %48 = vadd.xlane.f32.xlu0 %v47
    %v49 = vpop.xlane.xlu0 %48
    %v50 = vsel %vm41, %v34, 0.0
    %v51 = vadd.f32 %v33, %v50
    %52 = vadd.xlane.f32.xlu0 %v51
    %v53 = vpop.xlane.xlu0 %52
    %v54 = vsel %vm41, %v36, 0.0
    %v55 = vadd.f32 %v35, %v54
    %56 = vadd.xlane.f32.xlu0 %v55
    %v57 = vpop.xlane.xlu0 %56
    %v58 = vsel %vm41, %v38, 0.0
    %v59 = vadd.f32 %v37, %v58
    %60 = vadd.xlane.f32.xlu0 %v59
    %v61 = vpop.xlane.xlu0 %60
    %v62 = vsel %vm41, %v40, 0.0
    %v63 = vadd.f32 %v39, %v62
    %64 = vadd.xlane.f32.xlu0 %v63
    %v65 = vpop.xlane.xlu0 %64
    %v66 = vmul.f32 %v45, 0.0051020407
    %v67 = vmul.f32 %v49, 0.0051020407
    %v68 = vmul.f32 %v53, 0.0051020407
    %v69 = vmul.f32 %v57, 0.0051020407
    %v70 = vmul.f32 %v61, 0.0051020407
    %v71 = vmul.f32 %v65, 0.0051020407
    %v72 = vld [vmem:[%s1] sm:$0xff]
    %v73 = vld [vmem:[%s1 + $0x8] sm:$0xff]
    %v74 = vld [vmem:[%s1 + $0x10] sm:$0xff]
    %v81 = vlaneseq
    %v82 = vand.u32 %v81, 127
    %v83 = vlaneseq
    %v84 = vshrl.u32 %v83, 7
    %v85 = vsub.s32 %v82, %v84
    %v86 = vrot.slane %v66, %v85
    %v87 = vadd.s32 %v82, 4294967288
    %v88 = vlaneseq
    %v89 = vshrl.u32 %v88, 7
    %v90 = vsub.s32 %v87, %v89
    %v91 = vrot.slane %v67, %v90
    %vm92 = vcmask 130112
    %v93 = vsel %vm92, %v91, %v86
    %v94 = vadd.s32 %v82, 4294967280
    %v95 = vlaneseq
    %v96 = vshrl.u32 %v95, 7
    %v97 = vsub.s32 %v94, %v96
    %v98 = vrot.slane %v68, %v97
    %vm99 = vcmask 195712
    %v100 = vsel %vm99, %v98, %v93
    %v101 = vlaneseq
    %v102 = vshrl.u32 %v101, 7
    %v103 = vsub.s32 %v82, %v102
    %v104 = vrot.slane %v69, %v103
    %v105 = vlaneseq
    %v106 = vshrl.u32 %v105, 7
    %v107 = vsub.s32 %v87, %v106
    %v108 = vrot.slane %v70, %v107
    %v109 = vsel %vm92, %v108, %v104
    %v110 = vlaneseq
    %v111 = vshrl.u32 %v110, 7
    %v112 = vsub.s32 %v94, %v111
    %v113 = vrot.slane %v71, %v112
    %v114 = vsel %vm99, %v113, %v109
    %vm115 = vcmask 1041409
    %v116 = vsel %vm115, %v114, %v100
    %vm117 = vcmask 195584
    %v118 = vsel %vm117, %v116, 0
    %120 = vmatprep.subr.mxu0 0.0
    %121 = vmatpush1.msra.mxu0 %v72
    %122 = vmatprep.subr.mxu0 0.0
    %123 = vmatpush1.msra.mxu0 %v73
    %124 = vmatprep.subr.mxu0 0.0
    %125 = vmatpush1.msra.mxu0 %v74
    %126 = vmatprep.subr.mxu0 0.0
    %127 = vmatpush1.msra.mxu0 0.0
    %128 = vmatprep.subr.mxu0 0.0
    %129 = vmatpush1.msra.mxu0 0.0
    %130 = vmatprep.subr.mxu0 0.0
    %131 = vmatpush1.msra.mxu0 0.0
    %132 = vmatprep.subr.mxu0 0.0
    %133 = vmatpush1.msra.mxu0 0.0
    %134 = vmatprep.subr.mxu0 0.0
    %135 = vmatpush1.msra.mxu0 0.0
    %136 = vmatprep.subr.mxu0 0.0
    %137 = vmatpush1.msra.mxu0 0.0
    %138 = vmatprep.subr.mxu0 0.0
    %139 = vmatpush1.msra.mxu0 0.0
    %140 = vmatprep.subr.mxu0 0.0
    %141 = vmatpush1.msra.mxu0 0.0
    %142 = vmatprep.subr.mxu0 0.0
    %143 = vmatpush1.msra.mxu0 0.0
    %144 = vmatprep.subr.mxu0 0.0
    %145 = vmatpush1.msra.mxu0 0.0
    %146 = vmatprep.subr.mxu0 0.0
    %147 = vmatpush1.msra.mxu0 0.0
    %148 = vmatprep.subr.mxu0 0.0
    %149 = vmatpush1.msra.mxu0 0.0
    %150 = vmatprep.subr.mxu0 0.0
    %151 = vmatpush1.msra.mxu0 0.0
    %152 = vmatprep.subr.mxu0 0.0
    %153 = vmatpush1.msra.mxu0 0.0
    %154 = vmatprep.subr.mxu0 0.0
    %155 = vmatpush1.msra.mxu0 0.0
    %156 = vmatprep.subr.mxu0 0.0
    %157 = vmatpush1.msra.mxu0 0.0
    %158 = vmatprep.subr.mxu0 0.0
    %159 = vmatpush1.msra.mxu0 0.0
    %160 = vmatprep.subr.mxu0 0.0
    %161 = vmatpush1.msra.mxu0 0.0
    %162 = vmatprep.subr.mxu0 0.0
    %163 = vmatpush1.msra.mxu0 0.0
    %164 = vmatprep.subr.mxu0 0.0
    %165 = vmatpush1.msra.mxu0 0.0
    %166 = vmatprep.subr.mxu0 0.0
    %167 = vmatpush1.msra.mxu0 0.0
    %168 = vmatprep.subr.mxu0 0.0
    %169 = vmatpush1.msra.mxu0 0.0
    %170 = vmatprep.subr.mxu0 0.0
    %171 = vmatpush1.msra.mxu0 0.0
    %172 = vmatprep.subr.mxu0 0.0
    %173 = vmatpush1.msra.mxu0 0.0
    %174 = vmatprep.subr.mxu0 0.0
    %175 = vmatpush1.msra.mxu0 0.0
    %176 = vmatprep.subr.mxu0 0.0
    %177 = vmatpush1.msra.mxu0 0.0
    %178 = vmatprep.subr.mxu0 0.0
    %179 = vmatpush1.msra.mxu0 0.0
    %180 = vmatprep.subr.mxu0 0.0
    %181 = vmatpush1.msra.mxu0 0.0
    %182 = vmatprep.subr.mxu0 0.0
    %183 = vmatpush1.msra.mxu0 0.0
    %184 = vmatprep.mubr.f32.mxu0 0.0
    %185 = vmatmul.mubr.f32.gmra.mrb[0].mxu0 %v118
    %v186 = vpop.f32.mrb[0].mxu0
    %v187 = vadd.f32 0.0, %v186
    %v188 = vpop.f32.mrb[0].mxu0
    %189 = vdwg.mxu0
    %v190 = vmax.f32 %v187, 0.0
    %v191 = vld [vmem:[%s2] sm:$0xff]
    %v192 = vld [vmem:[%s2 + $0x8] sm:$0xf]
    %vm193 = vcmask 97280
    %v195 = vsel %vm193, %v190, 0
    %vm197 = vcmask 1043456
    %v199 = vsel %vm197, %v192, 0
    %201 = vmatprep.subr.mxu0 0.0
    %202 = vmatpush1.msra.mxu0 %v191
    %203 = vmatprep.subr.mxu0 0.0
    %204 = vmatpush1.msra.mxu0 %v199
    %205 = vmatprep.subr.mxu0 0.0
    %206 = vmatpush1.msra.mxu0 0.0
    %207 = vmatprep.subr.mxu0 0.0
    %208 = vmatpush1.msra.mxu0 0.0
    %209 = vmatprep.subr.mxu0 0.0
    %210 = vmatpush1.msra.mxu0 0.0
    %211 = vmatprep.subr.mxu0 0.0
    %212 = vmatpush1.msra.mxu0 0.0
    %213 = vmatprep.subr.mxu0 0.0
    %214 = vmatpush1.msra.mxu0 0.0
    %215 = vmatprep.subr.mxu0 0.0
    %216 = vmatpush1.msra.mxu0 0.0
    %217 = vmatprep.subr.mxu0 0.0
    %218 = vmatpush1.msra.mxu0 0.0
    %219 = vmatprep.subr.mxu0 0.0
    %220 = vmatpush1.msra.mxu0 0.0
    %221 = vmatprep.subr.mxu0 0.0
    %222 = vmatpush1.msra.mxu0 0.0
    %223 = vmatprep.subr.mxu0 0.0
    %224 = vmatpush1.msra.mxu0 0.0
    %225 = vmatprep.subr.mxu0 0.0
    %226 = vmatpush1.msra.mxu0 0.0
    %227 = vmatprep.subr.mxu0 0.0
    %228 = vmatpush1.msra.mxu0 0.0
    %229 = vmatprep.subr.mxu0 0.0
    %230 = vmatpush1.msra.mxu0 0.0
    %231 = vmatprep.subr.mxu0 0.0
    %232 = vmatpush1.msra.mxu0 0.0
    %233 = vmatprep.subr.mxu0 0.0
    %234 = vmatpush1.msra.mxu0 0.0
    %235 = vmatprep.subr.mxu0 0.0
    %236 = vmatpush1.msra.mxu0 0.0
    %237 = vmatprep.subr.mxu0 0.0
    %238 = vmatpush1.msra.mxu0 0.0
    %239 = vmatprep.subr.mxu0 0.0
    %240 = vmatpush1.msra.mxu0 0.0
    %241 = vmatprep.subr.mxu0 0.0
    %242 = vmatpush1.msra.mxu0 0.0
    %243 = vmatprep.subr.mxu0 0.0
    %244 = vmatpush1.msra.mxu0 0.0
    %245 = vmatprep.subr.mxu0 0.0
    %246 = vmatpush1.msra.mxu0 0.0
    %247 = vmatprep.subr.mxu0 0.0
    %248 = vmatpush1.msra.mxu0 0.0
    %249 = vmatprep.subr.mxu0 0.0
    %250 = vmatpush1.msra.mxu0 0.0
    %251 = vmatprep.subr.mxu0 0.0
    %252 = vmatpush1.msra.mxu0 0.0
    %253 = vmatprep.subr.mxu0 0.0
    %254 = vmatpush1.msra.mxu0 0.0
    %255 = vmatprep.subr.mxu0 0.0
    %256 = vmatpush1.msra.mxu0 0.0
    %257 = vmatprep.subr.mxu0 0.0
    %258 = vmatpush1.msra.mxu0 0.0
    %259 = vmatprep.subr.mxu0 0.0
    %260 = vmatpush1.msra.mxu0 0.0
    %261 = vmatprep.subr.mxu0 0.0
    %262 = vmatpush1.msra.mxu0 0.0
    %263 = vmatprep.subr.mxu0 0.0
    %264 = vmatpush1.msra.mxu0 0.0
    %265 = vmatprep.mubr.f32.mxu0 0.0
    %266 = vmatmul.mubr.f32.gmra.mrb[0].mxu0 %v195
    %v267 = vpop.f32.mrb[0].mxu0
    %v268 = vadd.f32 0.0, %v267
    %v269 = vpop.f32.mrb[0].mxu0
    %270 = vdwg.mxu0
    %v271 = vxor.u32 %v268, 2147483648
    %v272 = vmul.f32 %v271, 1.442695
    %v273 = vpow.pop %v272
    %v274 = vadd.f32 %v273, 1.0
    %v275 = vrcp.pop %v274
    %v276 = vmul.f32 1.0, %v275
    %v277 = vlaneseq
    %v278 = vshrl.u32 %v277, 7
    %v279 = vsub.s32 0, %v278
    %v280 = vrot.slane %v276, %v279
    %282 = vbcast.lane.b32.xlu0 %v280, 256
    %v283 = vpop.permute.xlu0 %282
    %s285 = sor.u32 256, 8
    %286 = vbcast.lane.b32.xlu0 %v280, %s285
    %v287 = vpop.permute.xlu0 %286
    %s289 = sor.u32 256, 16
    %290 = vbcast.lane.b32.xlu0 %v280, %s289
    %v291 = vpop.permute.xlu0 %290
    %v292 = vlaneseq
    %v293 = vshrl.u32 %v292, 7
    %v294 = vsub.s32 1, %v293
    %v295 = vrot.slane %v276, %v294
    %297 = vbcast.lane.b32.xlu0 %v295, 256
    %v298 = vpop.permute.xlu0 %297
    %s300 = sor.u32 256, 8
    %301 = vbcast.lane.b32.xlu0 %v295, %s300
    %v302 = vpop.permute.xlu0 %301
    %s304 = sor.u32 256, 16
    %305 = vbcast.lane.b32.xlu0 %v295, %s304
    %v306 = vpop.permute.xlu0 %305
    %v307 = vmul.f32 %v29, %v283
    %v308 = vmul.f32 %v30, %v283
    %v309 = vmul.f32 %v31, %v287
    %v310 = vmul.f32 %v32, %v287
    %v311 = vmul.f32 %v33, %v291
    %v312 = vmul.f32 %v34, %v291
    %v313 = vmul.f32 %v35, %v298
    %v314 = vmul.f32 %v36, %v298
    %v315 = vmul.f32 %v37, %v302
    %v316 = vmul.f32 %v38, %v302
    %v317 = vmul.f32 %v39, %v306
    %v318 = vmul.f32 %v40, %v306
    %319 = vst [vmem:[#allocation5] sm:$0xff] %v307
    %320 = vst.msk [vmem:[#allocation5 + $0x8] sm:$0xff] %vm41, %v308
    %321 = vst [vmem:[#allocation5 + $0x10] sm:$0xff] %v309
    %322 = vst.msk [vmem:[#allocation5 + $0x18] sm:$0xff] %vm41, %v310
    %323 = vst [vmem:[#allocation5 + $0x20] sm:$0xff] %v311
    %324 = vst.msk [vmem:[#allocation5 + $0x28] sm:$0xff] %vm41, %v312
    %325 = vst [vmem:[#allocation5 + $0x30] sm:$0xff] %v313
    %326 = vst.msk [vmem:[#allocation5 + $0x38] sm:$0xff] %vm41, %v314
    %327 = vst [vmem:[#allocation5 + $0x40] sm:$0xff] %v315
    %328 = vst.msk [vmem:[#allocation5 + $0x48] sm:$0xff] %vm41, %v316
    %329 = vst [vmem:[#allocation5 + $0x50] sm:$0xff] %v317
    %330 = vst.msk [vmem:[#allocation5 + $0x58] sm:$0xff] %vm41, %v318
    // Predicated region
    $region18: #{tpu_custom_call.1} parent=1 // pred_check
      _
    $region19: #{tpu_custom_call.1} parent=1 // pred_check_branch
      %332 = sbr.rel (0) target = $region21
    $region20: #{tpu_custom_call.1} parent=1 // pred_region
      %s334 = ssub.s32 1536, 1536
      %335 = vsyncadd [#allocation4], %s334
      %s336 = sshll.u32 [#allocation5], 4
      %s337 = int_to_ptr.vmem [resolvable:$true] %s336
      %342 = dma.vmem_to_hbm [thread:$0]  %s337, 1536, %s3, [#allocation4], 256, 256, 16
    $region21: #{tpu_custom_call.1} parent=1 // pred_fallthru
      _
    // Predicated region
    $region22: #{tpu_custom_call.1} parent=1 // pred_check
      _
    $region23: #{tpu_custom_call.1} parent=1 // pred_check_branch
      %344 = sbr.rel (0) target = $region25
    $region24: #{tpu_custom_call.1} parent=1 // pred_region
      %345 = dma.done [#allocation4], 1536
    $region25: #{tpu_custom_call.1} parent=1 // pred_fallthru
      _
    %346 = vsyncpa [#allocation3], 1
    %347 = vsyncpa [#allocation4], 1

</llo_original>
